<compile_context>
chip_gen: v7x
topology: tpu7x:2x2x1
jax: 0.10.0
libtpu: 0.0.40
codegen_flags: <defaults>
</compile_context>

<pallas_src>
from functools import partial

import jax
import jax.numpy as jnp
from jax import lax
from jax.experimental import pallas as pl
from jax.experimental.pallas import tpu as pltpu


_INV_SQRT2 = 0.7071067811865476
_SQRT_2_OVER_PI = 0.7978845608028654


def _gelu(x, approximate=False):
    if approximate:
        # tanh approximation (EUP transcendental); deviates slightly from
        # torch.nn.functional.gelu's exact default.
        return 0.5 * x * (1.0 + jnp.tanh(_SQRT_2_OVER_PI * (x + 0.044715 * x * x * x)))
    # Exact (erf-based) GELU, matching torch's default.
    return x * 0.5 * (1.0 + lax.erf(x * _INV_SQRT2))


def _round_up(x, m):
    return -(-x // m) * m


def _vmem_limit_bytes():
    """Per-generation scoped-VMEM limit (v7x: 64 MiB phys, v5e/v6e: 128 MiB)."""
    cap = 64 << 20
    try:
        info = pltpu.get_tpu_info()
        cap = int(getattr(info, "vmem_capacity_bytes", cap) or cap)
    except Exception:
        pass
    return int(min((cap * 3) // 4, 96 << 20))


def _pick_tile_h(h, w_sp, c, cm, budget_bytes):
    """Largest H tile whose *padded* ((8,128)-tiled) f32 working set fits."""
    wc_pad = _round_up(w_sp * c, 128)
    wcm_pad = _round_up(w_sp * cm, 128)

    def working_set(th):
        rows_h1 = _round_up(th + 2, 8)
        rows = _round_up(max(th, 8), 8)
        hidden = rows_h1 * wcm_pad          # stage-1 activation (TH+2 rows)
        interm = 4 * rows * wcm_pad         # acc / rolled taps / gelu temps
        xband = rows_h1 * wc_pad            # input band
        out_blk = 2 * rows * wc_pad         # double-buffered output block
        return 4 * (hidden + interm + xband + out_blk)

    divisors = [d for d in range(1, h + 1) if h % d == 0]
    aligned = [d for d in divisors if d % 8 == 0 or d == h] or divisors
    fitting = [d for d in aligned if working_set(d) <= budget_bytes]
    return max(fitting) if fitting else min(aligned)


def _block_diag_expand(w, reps):
    """w: (A, B) -> block-diagonal (reps*A, reps*B) with w repeated on the diagonal."""
    a, bdim = w.shape
    eye = jnp.eye(reps, dtype=w.dtype)
    return jnp.einsum("ij,ab->iajb", eye, w).reshape(reps * a, reps * bdim)


# ---------------------------------------------------------------------------
# Fused kernel: 1x1 conv -> GELU -> depthwise 3x3 -> GELU -> 1x1 conv
# for one (batch, H-tile) grid point.  Every array is lane-dense 2D.
# ---------------------------------------------------------------------------
def _ff_fused_kernel(x_ref, w1e_ref, wdwt_ref, w3e_ref, o_ref, *,
                     TH, W, C, CM, APPROX):
    """
    x_ref   : (H+2, W*C)    zero-row-padded full image (VMEM-resident per batch)
    w1e_ref : (W*C, W*CM)   block-diag expanded 1x1 conv #1 weight (f32)
    wdwt_ref: (9, W*CM)     depthwise 3x3 weight, tiled across W (f32)
    w3e_ref : (W*CM, W*C)   block-diag expanded 1x1 conv #2 weight (f32)
    o_ref   : (TH, W*C)     output tile (dense, unmasked store)
    """
    del C  # channel count is folded into the lane-dense layouts
    hi = pl.program_id(1)
    WCM = W * CM

    # Weights: already f32 (casts hoisted to the wrapper); read once.
    w1e = w1e_ref[...]
    w3e = w3e_ref[...]
    wdwt = wdwt_ref[...]

    # ---- Stage 1: 1x1 conv + GELU over the TH+2 row band (incl. halo) ------
    r0 = pl.multiple_of(hi * TH, TH)
    xb = x_ref[pl.ds(r0, TH + 2), :].astype(jnp.float32)          # (TH+2, W*C)
    h1 = _gelu(jnp.dot(xb, w1e, preferred_element_type=jnp.float32), APPROX)

    # ---- Stage 2: depthwise 3x3 + GELU --------------------------------------
    # dh -> row-band slice of h1; dw -> lane roll (XLU) + hoisted edge mask.
    lane = lax.broadcasted_iota(jnp.int32, (TH, WCM), 1)
    has_left = lane >= CM                 # w-1 >= 0
    has_right = lane < (W - 1) * CM       # w+1 <= W-1
    wrows = [wdwt[k][None, :] for k in range(9)]   # hoisted tap broadcasts

    acc = jnp.zeros((TH, WCM), jnp.float32)
    for dh in range(3):
        band = h1[dh:dh + TH, :]                                  # (TH, W*CM)
        acc = acc + band * wrows[dh * 3 + 1]                      # center tap
        left = pltpu.roll(band, shift=CM, axis=1)                 # w-1 tap
        acc = acc + jnp.where(has_left, left, 0.0) * wrows[dh * 3 + 0]
        right = pltpu.roll(band, shift=WCM - CM, axis=1)          # w+1 tap
        acc = acc + jnp.where(has_right, right, 0.0) * wrows[dh * 3 + 2]
    h2 = _gelu(acc, APPROX)

    # ---- Stage 3: 1x1 conv back to C channels; dense store ------------------
    out = jnp.dot(h2, w3e, preferred_element_type=jnp.float32)    # (TH, W*C)
    o_ref[...] = out.astype(o_ref.dtype)


# ---------------------------------------------------------------------------
# FeedForward forward pass.
#   x:    [b, h, w, c]
#   w1:   [c, c*mult]     (1x1 conv #1 weight, as channel matmul)
#   w_dw: [9, c*mult]     (depthwise 3x3 weight, flattened (kh*3+kw) x channel)
#   w3:   [c*mult, c]     (1x1 conv #2 weight, as channel matmul)
# ---------------------------------------------------------------------------
def feed_forward(x, w1, w_dw, w3, *, tile_h=None, approximate_gelu=False):
    b, h, w_sp, c = x.shape
    cm = w1.shape[1]
    wc = w_sp * c
    wcm = w_sp * cm
    f32 = jnp.float32

    # Lane-dense fold of channels into the last dim + one zero halo row
    # top/bottom (bias-free conv and GELU(0)=0, so padding commutes).
    x2 = jnp.pad(x.reshape(b, h, wc), ((0, 0), (1, 1), (0, 0)))

    # Weights prepared once in the wrapper (casts/broadcasts hoisted out of
    # the kernel).  Block-diagonal expansion keeps the 1x1 convs lane-dense
    # with zero in-kernel relayouts.
    # TODO(synk): for large W*C / W*CM (where the (W*C, W*CM) expansion stops
    # fitting VMEM) switch stages 1/3 to direct (C,CM)/(CM,C) channel matmuls
    # on a (TH*W, C) view, and H-tile x with an explicit 2-row-halo DMA.
    w1e = _block_diag_expand(w1.astype(f32), w_sp)        # (W*C, W*CM)
    w3e = _block_diag_expand(w3.astype(f32), w_sp)        # (W*CM, W*C)
    wdwt = jnp.tile(w_dw.astype(f32), (1, w_sp))          # (9, W*CM)

    # Tile-H from the *padded* working set and per-generation VMEM capacity.
    vmem_limit = _vmem_limit_bytes()
    wc_pad, wcm_pad = _round_up(wc, 128), _round_up(wcm, 128)
    fixed = 4 * (2 * (h + 2) * wc_pad                  # resident padded image
                 + 2 * _round_up(wc, 8) * wcm_pad      # w1e buffers
                 + 2 * _round_up(wcm, 8) * wc_pad      # w3e buffers
                 + 2 * 16 * wcm_pad)                   # wdwt buffers
    budget = max(vmem_limit - fixed - (4 << 20), 1 << 20)
    if tile_h is None:
        tile_h = _pick_tile_h(h, w_sp, c, cm, budget)
    assert h % tile_h == 0, "tile_h must divide h"
    nh = h // tile_h

    kernel = partial(_ff_fused_kernel, TH=tile_h, W=w_sp, C=c, CM=cm,
                     APPROX=approximate_gelu)

    # Megacore: split cores over the batch when possible so the resident
    # image is not duplicated per core; for b == 1 fall back to splitting H.
    dims = ("parallel", "parallel" if b == 1 else "arbitrary")

    out2 = pl.pallas_call(
        kernel,
        out_shape=jax.ShapeDtypeStruct((b, h, wc), x.dtype),
        grid_spec=pltpu.PrefetchScalarGridSpec(
            num_scalar_prefetch=0,
            grid=(b, nh),
            in_specs=[
                # Full (row-padded) image per batch; block index constant in
                # hi, so it is DMA'd once per image and stays VMEM-resident.
                pl.BlockSpec((None, h + 2, wc), lambda bi, hi: (bi, 0, 0)),
                pl.BlockSpec((wc, wcm), lambda bi, hi: (0, 0)),
                pl.BlockSpec((9, wcm), lambda bi, hi: (0, 0)),
                pl.BlockSpec((wcm, wc), lambda bi, hi: (0, 0)),
            ],
            out_specs=pl.BlockSpec((None, tile_h, wc),
                                   lambda bi, hi: (bi, hi, 0)),
        ),
        compiler_params=pltpu.CompilerParams(
            dimension_semantics=dims,
            vmem_limit_bytes=vmem_limit,
        ),
    )(x2, w1e, wdwt, w3e)

    return out2.reshape(b, h, w_sp, c)


# Pure-JAX reference (silent correctness check).
def _feed_forward_ref(x, w1, w_dw, w3):
    b, h, w, _ = x.shape
    cm = w1.shape[1]
    xf = x.astype(jnp.float32)
    y = _gelu(jnp.einsum("bhwc,cd->bhwd", xf, w1.astype(jnp.float32)))
    yp = jnp.pad(y, ((0, 0), (1, 1), (1, 1), (0, 0)))
    acc = jnp.zeros((b, h, w, cm), jnp.float32)
    for dh in range(3):
        for dw in range(3):
            acc = acc + (yp[:, dh:dh + h, dw:dw + w, :]
                         * w_dw[dh * 3 + dw].astype(jnp.float32))
    y = _gelu(acc)
    return jnp.einsum("bhwd,dc->bhwc", y, w3.astype(jnp.float32)).astype(x.dtype)


if __name__ == "__main__":
    # Small shapes consistent with the module: dim=4, mult=4 -> hidden=16.
    b, h, w, dim, mult = 2, 16, 16, 4, 4
    cm = dim * mult

    key = jax.random.PRNGKey(0)
    kx, k1, k2, k3 = jax.random.split(key, 4)
    x = jax.random.normal(kx, (b, h, w, dim), dtype=jnp.float32)
    w1 = jax.random.normal(k1, (dim, cm), dtype=jnp.float32) * 0.1
    w_dw = jax.random.normal(k2, (9, cm), dtype=jnp.float32) * 0.1
    w3 = jax.random.normal(k3, (cm, dim), dtype=jnp.float32) * 0.1

    ref = _feed_forward_ref(x, w1, w_dw, w3)

    # Default tiling (single H tile at these shapes).
    out = jax.block_until_ready(feed_forward(x, w1, w_dw, w3))
    assert out.shape == (b, h, w, dim)
    assert jnp.allclose(out, ref, atol=1e-4, rtol=1e-4)

    # Forced multi-tile run to also exercise the row-halo path.
    out_tiled = jax.block_until_ready(feed_forward(x, w1, w_dw, w3, tile_h=8))
    assert jnp.allclose(out_tiled, ref, atol=1e-4, rtol=1e-4)

    print("KERNEL_OK")
</pallas_src>

<mosaic_0001>
module attributes {stable_mosaic.version = 11 : i64} {
  func.func @_ff_fused_kernel(%arg0: i32, %arg1: i32, %arg2: memref<1x18x64xf32, #tpu.memory_space<vmem>>, %arg3: memref<64x256xf32, #tpu.memory_space<vmem>>, %arg4: memref<9x256xf32, #tpu.memory_space<vmem>>, %arg5: memref<256x64xf32, #tpu.memory_space<vmem>>, %arg6: memref<1x16x64xf32, #tpu.memory_space<vmem>>) attributes {dimension_semantics = [#tpu.dimension_semantics<parallel>, #tpu.dimension_semantics<arbitrary>], iteration_bounds = array<i64: 2, 1>, scalar_prefetch = 0 : i64, scratch_operands = 0 : i64, tpu.core_type = #tpu.core_type<tc>, window_params = [{transform_indices = @transform_0, window_bounds = array<i64: 1, 18, 64>}, {pipeline_mode = #tpu.pipeline_mode<synchronous>, transform_indices = @transform_1, window_bounds = array<i64: 64, 256>}, {pipeline_mode = #tpu.pipeline_mode<synchronous>, transform_indices = @transform_2, window_bounds = array<i64: 9, 256>}, {pipeline_mode = #tpu.pipeline_mode<synchronous>, transform_indices = @transform_3, window_bounds = array<i64: 256, 64>}, {transform_indices = @transform_4, window_bounds = array<i64: 1, 16, 64>}]} {
    %c0 = arith.constant 0 : index
    %c0_0 = arith.constant 0 : index
    %0 = vector.load %arg3[%c0, %c0_0] : memref<64x256xf32, #tpu.memory_space<vmem>>, vector<64x256xf32>
    %c0_1 = arith.constant 0 : index
    %c0_2 = arith.constant 0 : index
    %1 = vector.load %arg5[%c0_1, %c0_2] : memref<256x64xf32, #tpu.memory_space<vmem>>, vector<256x64xf32>
    %c0_3 = arith.constant 0 : index
    %c0_4 = arith.constant 0 : index
    %2 = vector.load %arg4[%c0_3, %c0_4] : memref<9x256xf32, #tpu.memory_space<vmem>>, vector<9x256xf32>
    %c16_i32 = arith.constant 16 : i32
    %3 = arith.muli %arg1, %c16_i32 : i32
    %4 = tpu.assume_multiple %3, 16 : i32
    %c0_5 = arith.constant 0 : index
    %5 = arith.index_cast %4 : i32 to index
    %c0_6 = arith.constant 0 : index
    %6 = vector.load %arg2[%c0_5, %5, %c0_6] : memref<1x18x64xf32, #tpu.memory_space<vmem>>, vector<1x18x64xf32>
    %7 = vector.shape_cast %6 : vector<1x18x64xf32> to vector<18x64xf32>
    %cst = arith.constant dense<0.000000e+00> : vector<18x256xf32>
    %8 = tpu.matmul %7, %0, %cst {dimension_numbers = #tpu.dot_dimension_numbers<[1], [0], [0], [1], [0, 0, 1, 1], [], []>} : vector<18x64xf32>, vector<64x256xf32>, vector<18x256xf32> -> vector<18x256xf32>
    %cst_7 = arith.constant 5.000000e-01 : f32
    %9 = vector.broadcast %cst_7 : f32 to vector<18x256xf32>
    %10 = arith.mulf %8, %9 : vector<18x256xf32>
    %cst_8 = arith.constant 0.707106769 : f32
    %11 = vector.broadcast %cst_8 : f32 to vector<18x256xf32>
    %12 = arith.mulf %8, %11 : vector<18x256xf32>
    %13 = math.erf %12 : vector<18x256xf32>
    %cst_9 = arith.constant 1.000000e+00 : f32
    %14 = vector.broadcast %cst_9 : f32 to vector<18x256xf32>
    %15 = arith.addf %14, %13 : vector<18x256xf32>
    %16 = arith.mulf %10, %15 : vector<18x256xf32>
    %17 = tpu.iota {dimensions = array<i32: 1>} : vector<16x256xi32>
    %c16_i32_10 = arith.constant 16 : i32
    %18 = vector.broadcast %c16_i32_10 : i32 to vector<16x256xi32>
    %19 = arith.cmpi sge, %17, %18 : vector<16x256xi32>
    %c240_i32 = arith.constant 240 : i32
    %20 = vector.broadcast %c240_i32 : i32 to vector<16x256xi32>
    %21 = arith.cmpi slt, %17, %20 : vector<16x256xi32>
    %22 = vector.extract_strided_slice %2 {offsets = [0, 0], sizes = [1, 256], strides = [1, 1]} : vector<9x256xf32> to vector<1x256xf32>
    %23 = vector.shape_cast %22 : vector<1x256xf32> to vector<256xf32>
    %24 = vector.shape_cast %23 : vector<256xf32> to vector<1x256xf32>
    %25 = vector.extract_strided_slice %2 {offsets = [1, 0], sizes = [1, 256], strides = [1, 1]} : vector<9x256xf32> to vector<1x256xf32>
    %26 = vector.shape_cast %25 : vector<1x256xf32> to vector<256xf32>
    %27 = vector.shape_cast %26 : vector<256xf32> to vector<1x256xf32>
    %28 = vector.extract_strided_slice %2 {offsets = [2, 0], sizes = [1, 256], strides = [1, 1]} : vector<9x256xf32> to vector<1x256xf32>
    %29 = vector.shape_cast %28 : vector<1x256xf32> to vector<256xf32>
    %30 = vector.shape_cast %29 : vector<256xf32> to vector<1x256xf32>
    %31 = vector.extract_strided_slice %2 {offsets = [3, 0], sizes = [1, 256], strides = [1, 1]} : vector<9x256xf32> to vector<1x256xf32>
    %32 = vector.shape_cast %31 : vector<1x256xf32> to vector<256xf32>
    %33 = vector.shape_cast %32 : vector<256xf32> to vector<1x256xf32>
    %34 = vector.extract_strided_slice %2 {offsets = [4, 0], sizes = [1, 256], strides = [1, 1]} : vector<9x256xf32> to vector<1x256xf32>
    %35 = vector.shape_cast %34 : vector<1x256xf32> to vector<256xf32>
    %36 = vector.shape_cast %35 : vector<256xf32> to vector<1x256xf32>
    %37 = vector.extract_strided_slice %2 {offsets = [5, 0], sizes = [1, 256], strides = [1, 1]} : vector<9x256xf32> to vector<1x256xf32>
    %38 = vector.shape_cast %37 : vector<1x256xf32> to vector<256xf32>
    %39 = vector.shape_cast %38 : vector<256xf32> to vector<1x256xf32>
    %40 = vector.extract_strided_slice %2 {offsets = [6, 0], sizes = [1, 256], strides = [1, 1]} : vector<9x256xf32> to vector<1x256xf32>
    %41 = vector.shape_cast %40 : vector<1x256xf32> to vector<256xf32>
    %42 = vector.shape_cast %41 : vector<256xf32> to vector<1x256xf32>
    %43 = vector.extract_strided_slice %2 {offsets = [7, 0], sizes = [1, 256], strides = [1, 1]} : vector<9x256xf32> to vector<1x256xf32>
    %44 = vector.shape_cast %43 : vector<1x256xf32> to vector<256xf32>
    %45 = vector.shape_cast %44 : vector<256xf32> to vector<1x256xf32>
    %46 = vector.extract_strided_slice %2 {offsets = [8, 0], sizes = [1, 256], strides = [1, 1]} : vector<9x256xf32> to vector<1x256xf32>
    %47 = vector.shape_cast %46 : vector<1x256xf32> to vector<256xf32>
    %48 = vector.shape_cast %47 : vector<256xf32> to vector<1x256xf32>
    %cst_11 = arith.constant 0.000000e+00 : f32
    %49 = vector.broadcast %cst_11 : f32 to vector<16x256xf32>
    %50 = vector.extract_strided_slice %16 {offsets = [0, 0], sizes = [16, 256], strides = [1, 1]} : vector<18x256xf32> to vector<16x256xf32>
    %51 = vector.broadcast %27 : vector<1x256xf32> to vector<16x256xf32>
    %52 = arith.mulf %50, %51 : vector<16x256xf32>
    %53 = arith.addf %49, %52 : vector<16x256xf32>
    %c16_i32_12 = arith.constant 16 : i32
    %54 = tpu.dynamic_rotate %50 by %c16_i32_12 dim 1 : vector<16x256xf32>, i32 -> vector<16x256xf32>
    %cst_13 = arith.constant 0.000000e+00 : f32
    %55 = vector.broadcast %cst_13 : f32 to vector<16x256xf32>
    %56 = arith.select %19, %54, %55 : vector<16x256xi1>, vector<16x256xf32>
    %57 = vector.broadcast %24 : vector<1x256xf32> to vector<16x256xf32>
    %58 = arith.mulf %56, %57 : vector<16x256xf32>
    %59 = arith.addf %53, %58 : vector<16x256xf32>
    %c240_i32_14 = arith.constant 240 : i32
    %60 = tpu.dynamic_rotate %50 by %c240_i32_14 dim 1 : vector<16x256xf32>, i32 -> vector<16x256xf32>
    %cst_15 = arith.constant 0.000000e+00 : f32
    %61 = vector.broadcast %cst_15 : f32 to vector<16x256xf32>
    %62 = arith.select %21, %60, %61 : vector<16x256xi1>, vector<16x256xf32>
    %63 = vector.broadcast %30 : vector<1x256xf32> to vector<16x256xf32>
    %64 = arith.mulf %62, %63 : vector<16x256xf32>
    %65 = arith.addf %59, %64 : vector<16x256xf32>
    %66 = vector.extract_strided_slice %16 {offsets = [1, 0], sizes = [16, 256], strides = [1, 1]} : vector<18x256xf32> to vector<16x256xf32>
    %67 = vector.broadcast %36 : vector<1x256xf32> to vector<16x256xf32>
    %68 = arith.mulf %66, %67 : vector<16x256xf32>
    %69 = arith.addf %65, %68 : vector<16x256xf32>
    %c16_i32_16 = arith.constant 16 : i32
    %70 = tpu.dynamic_rotate %66 by %c16_i32_16 dim 1 : vector<16x256xf32>, i32 -> vector<16x256xf32>
    %cst_17 = arith.constant 0.000000e+00 : f32
    %71 = vector.broadcast %cst_17 : f32 to vector<16x256xf32>
    %72 = arith.select %19, %70, %71 : vector<16x256xi1>, vector<16x256xf32>
    %73 = vector.broadcast %33 : vector<1x256xf32> to vector<16x256xf32>
    %74 = arith.mulf %72, %73 : vector<16x256xf32>
    %75 = arith.addf %69, %74 : vector<16x256xf32>
    %c240_i32_18 = arith.constant 240 : i32
    %76 = tpu.dynamic_rotate %66 by %c240_i32_18 dim 1 : vector<16x256xf32>, i32 -> vector<16x256xf32>
    %cst_19 = arith.constant 0.000000e+00 : f32
    %77 = vector.broadcast %cst_19 : f32 to vector<16x256xf32>
    %78 = arith.select %21, %76, %77 : vector<16x256xi1>, vector<16x256xf32>
    %79 = vector.broadcast %39 : vector<1x256xf32> to vector<16x256xf32>
    %80 = arith.mulf %78, %79 : vector<16x256xf32>
    %81 = arith.addf %75, %80 : vector<16x256xf32>
    %82 = vector.extract_strided_slice %16 {offsets = [2, 0], sizes = [16, 256], strides = [1, 1]} : vector<18x256xf32> to vector<16x256xf32>
    %83 = vector.broadcast %45 : vector<1x256xf32> to vector<16x256xf32>
    %84 = arith.mulf %82, %83 : vector<16x256xf32>
    %85 = arith.addf %81, %84 : vector<16x256xf32>
    %c16_i32_20 = arith.constant 16 : i32
    %86 = tpu.dynamic_rotate %82 by %c16_i32_20 dim 1 : vector<16x256xf32>, i32 -> vector<16x256xf32>
    %cst_21 = arith.constant 0.000000e+00 : f32
    %87 = vector.broadcast %cst_21 : f32 to vector<16x256xf32>
    %88 = arith.select %19, %86, %87 : vector<16x256xi1>, vector<16x256xf32>
    %89 = vector.broadcast %42 : vector<1x256xf32> to vector<16x256xf32>
    %90 = arith.mulf %88, %89 : vector<16x256xf32>
    %91 = arith.addf %85, %90 : vector<16x256xf32>
    %c240_i32_22 = arith.constant 240 : i32
    %92 = tpu.dynamic_rotate %82 by %c240_i32_22 dim 1 : vector<16x256xf32>, i32 -> vector<16x256xf32>
    %cst_23 = arith.constant 0.000000e+00 : f32
    %93 = vector.broadcast %cst_23 : f32 to vector<16x256xf32>
    %94 = arith.select %21, %92, %93 : vector<16x256xi1>, vector<16x256xf32>
    %95 = vector.broadcast %48 : vector<1x256xf32> to vector<16x256xf32>
    %96 = arith.mulf %94, %95 : vector<16x256xf32>
    %97 = arith.addf %91, %96 : vector<16x256xf32>
    %cst_24 = arith.constant 5.000000e-01 : f32
    %98 = vector.broadcast %cst_24 : f32 to vector<16x256xf32>
    %99 = arith.mulf %97, %98 : vector<16x256xf32>
    %cst_25 = arith.constant 0.707106769 : f32
    %100 = vector.broadcast %cst_25 : f32 to vector<16x256xf32>
    %101 = arith.mulf %97, %100 : vector<16x256xf32>
    %102 = math.erf %101 : vector<16x256xf32>
    %cst_26 = arith.constant 1.000000e+00 : f32
    %103 = vector.broadcast %cst_26 : f32 to vector<16x256xf32>
    %104 = arith.addf %103, %102 : vector<16x256xf32>
    %105 = arith.mulf %99, %104 : vector<16x256xf32>
    %cst_27 = arith.constant dense<0.000000e+00> : vector<16x64xf32>
    %106 = tpu.matmul %105, %1, %cst_27 {dimension_numbers = #tpu.dot_dimension_numbers<[1], [0], [0], [1], [0, 0, 1, 1], [], []>} : vector<16x256xf32>, vector<256x64xf32>, vector<16x64xf32> -> vector<16x64xf32>
    %c0_28 = arith.constant 0 : index
    %c0_29 = arith.constant 0 : index
    %c0_30 = arith.constant 0 : index
    %107 = vector.load %arg6[%c0_28, %c0_29, %c0_30] : memref<1x16x64xf32, #tpu.memory_space<vmem>>, vector<1x16x64xf32>
    %108 = vector.shape_cast %107 : vector<1x16x64xf32> to vector<16x64xf32>
    %109 = vector.shape_cast %106 : vector<16x64xf32> to vector<1x16x64xf32>
    tpu.vector_store %arg6[%c0_28, %c0_29, %c0_30], %109 {strides = array<i32>} : memref<1x16x64xf32, #tpu.memory_space<vmem>>, vector<1x16x64xf32>,
    return
  }
  func.func @transform_0(%arg0: i32, %arg1: i32) -> (i32, i32, i32) {
    %c0_i32 = arith.constant 0 : i32
    %c0_i32_0 = arith.constant 0 : i32
    %c0_i32_1 = arith.constant 0 : i32
    return %arg0, %c0_i32, %c0_i32_0 : i32, i32, i32
  }
  func.func @transform_1(%arg0: i32, %arg1: i32) -> (i32, i32) {
    %c0_i32 = arith.constant 0 : i32
    %c0_i32_0 = arith.constant 0 : i32
    %c0_i32_1 = arith.constant 0 : i32
    return %c0_i32, %c0_i32_0 : i32, i32
  }
  func.func @transform_2(%arg0: i32, %arg1: i32) -> (i32, i32) {
    %c0_i32 = arith.constant 0 : i32
    %c0_i32_0 = arith.constant 0 : i32
    %c0_i32_1 = arith.constant 0 : i32
    return %c0_i32, %c0_i32_0 : i32, i32
  }
  func.func @transform_3(%arg0: i32, %arg1: i32) -> (i32, i32) {
    %c0_i32 = arith.constant 0 : i32
    %c0_i32_0 = arith.constant 0 : i32
    %c0_i32_1 = arith.constant 0 : i32
    return %c0_i32, %c0_i32_0 : i32, i32
  }
  func.func @transform_4(%arg0: i32, %arg1: i32) -> (i32, i32, i32) {
    %c0_i32 = arith.constant 0 : i32
    %c0_i32_0 = arith.constant 0 : i32
    return %arg0, %arg1, %c0_i32 : i32, i32, i32
  }
}

</mosaic_0001>

<llo_original>
// kernel: tpu_custom_call.1
$region0: #{tpu_custom_call.1}
  #allocation0 [shape = 'u32[]', space=smem, size = 0x4, offset = 0x4, fixed_abs, tag = 'smem constant byte address 0x4 - core index']
  #allocation1 [shape = 'u32[144,128]{1,0:T(1,128)}', space=vmem, size = 0x12000, scoped, tag = 'internal scratch']
  %s0 = inlined_call_operand.vmem [shape: f32[2,18,64], index: 0, kind: input, shape index: {}]
  %s1 = inlined_call_operand.vmem [shape: f32[64,256], index: 1, kind: input, shape index: {}]
  %s2 = inlined_call_operand.vmem [shape: f32[9,256], index: 2, kind: input, shape index: {}]
  %s3 = inlined_call_operand.vmem [shape: f32[256,64], index: 3, kind: input, shape index: {}]
  %s4 = inlined_call_operand.hbm [shape: f32[2,16,64], index: 4, kind: output, shape index: {}]
  %s5 = sld [smem:[#allocation0]]
  $region49: #{tpu_custom_call.1} parent=0
    _
  %s7 = ssub.s32 1, %s5
  %s8 = scalar_select 0, %s7, %s5
  $region1: #{tpu_custom_call.1} parent=0
    #allocation2 [shape = 'u8[16384]{0}', space=vmem, size = 0x4000, scoped, tag = 'output window, operand 0']
    #allocation3 [shape = 's32[2]{0}', space=sflag, size = 0x8, scoped, tag = 'scoped memory for tpu_custom_call.1']
    %9 = vsyncpa [#allocation3], 0
    %s10 = scalar_lea.sflag [#allocation3], 1
    %11 = vsyncpa %s10, 0
    loop: start=0, step=1, limit=4
    $region2: #{tpu_custom_call.1} parent=1 // loop_pre_header
      _
    $region3: #{tpu_custom_call.1} parent=1 // loop_header
      %s13 = sphi 0, %s17
      %p14 = scmp.ge.s32.totalorder %s13, 4
      %s20 = sphi 0, %s32
      %s21 = sphi 0, %s28
      %s22 = sphi 0, %s20
      %s23 = sphi 0, %s21
      %s24 = sphi 0, %s22
      %s25 = sphi 0, %s23
      %s35 = sphi 0, %s37
      %s38 = sphi 0, %s35
      %s39 = sphi 0, %s38
      %s55 = sphi 0, %s39
      %s59 = sphi 0, %s59
      %s61 = sphi 0, %s59
      %s62 = sphi 0, %s61
      %s76 = sphi 0, %s62
      %s80 = sphi 0, %s80
      %s82 = sphi 0, %s80
      %s83 = sphi 0, %s82
      %s97 = sphi 0, %s83
      %s101 = sphi 0, %s101
      %s103 = sphi 0, %s101
      %s104 = sphi 0, %s103
      %s118 = sphi 0, %s104
      %s126 = sphi 0, %s128
      %s129 = sphi 0, %s126
      %s130 = sphi 0, %s129
      %s146 = sphi 0, %s130
    $region4: #{tpu_custom_call.1} parent=1 // loop_header_branch
      %16 = sbr.rel (%p14) target = $region8
    $region5: #{tpu_custom_call.1} parent=1 // loop_body
      %s18 = ssub.s32 %s13, 1
      %s19 = ssub.s32 %s13, 2
      %s26 = sadd.s32 1, %s21
      %p27 = scmp.ge.s32.totalorder %s26, 1
      %s28 = scalar_select %p27, 0, %s26
      %s29 = sadd.s32 1, %s20
      %s30 = scalar_select %p27, %s29, %s20
      %p31 = scmp.ge.s32.totalorder %s30, 2
      %s32 = scalar_select %p31, 0, %s30
      %s33 = ssub.s32 %s20, %s32
      %p34 = scmp.eq.s32.totalorder %s33, 0
      %s36 = sadd.s32 %s35, 1
      %s37 = scalar_select %p34, %s35, %s36
      %p40 = pneg %p34
      %p41 = scmp.eq.s32.totalorder %s13, 1
      %p42 = por %p40, %p41
      %p43 = scmp.ne.s32.totalorder %s35, %s38
      %p44 = scmp.eq.s32.totalorder %s13, 0
      %p45 = por %p43, %p44
      %p46 = scmp.ne.s32.totalorder %s35, %s38
      %p47 = scmp.eq.s32.totalorder %s18, 1
      %p48 = por %p46, %p47
      %p49 = scmp.ne.s32.totalorder %s38, %s39
      %p50 = scmp.eq.s32.totalorder %s18, 0
      %p51 = por %p49, %p50
      %p52 = scmp.ne.s32.totalorder %s38, %s39
      %p53 = scmp.eq.s32.totalorder %s19, 1
      %p54 = por %p52, %p53
      %p56 = scmp.ne.s32.totalorder %s39, %s55
      %p57 = scmp.eq.s32.totalorder %s19, 0
      %p58 = por %p56, %p57
      %s60 = sadd.s32 %s59, 1
      %p63 = scmp.eq.s32.totalorder %s13, 1
      %p64 = scmp.ne.s32.totalorder %s59, %s61
      %p65 = scmp.eq.s32.totalorder %s13, 0
      %p66 = por %p64, %p65
      %p67 = scmp.ne.s32.totalorder %s59, %s61
      %p68 = scmp.eq.s32.totalorder %s18, 1
      %p69 = por %p67, %p68
      %p70 = scmp.ne.s32.totalorder %s61, %s62
      %p71 = scmp.eq.s32.totalorder %s18, 0
      %p72 = por %p70, %p71
      %p73 = scmp.ne.s32.totalorder %s61, %s62
      %p74 = scmp.eq.s32.totalorder %s19, 1
      %p75 = por %p73, %p74
      %p77 = scmp.ne.s32.totalorder %s62, %s76
      %p78 = scmp.eq.s32.totalorder %s19, 0
      %p79 = por %p77, %p78
      %s81 = sadd.s32 %s80, 1
      %p84 = scmp.eq.s32.totalorder %s13, 1
      %p85 = scmp.ne.s32.totalorder %s80, %s82
      %p86 = scmp.eq.s32.totalorder %s13, 0
      %p87 = por %p85, %p86
      %p88 = scmp.ne.s32.totalorder %s80, %s82
      %p89 = scmp.eq.s32.totalorder %s18, 1
      %p90 = por %p88, %p89
      %p91 = scmp.ne.s32.totalorder %s82, %s83
      %p92 = scmp.eq.s32.totalorder %s18, 0
      %p93 = por %p91, %p92
      %p94 = scmp.ne.s32.totalorder %s82, %s83
      %p95 = scmp.eq.s32.totalorder %s19, 1
      %p96 = por %p94, %p95
      %p98 = scmp.ne.s32.totalorder %s83, %s97
      %p99 = scmp.eq.s32.totalorder %s19, 0
      %p100 = por %p98, %p99
      %s102 = sadd.s32 %s101, 1
      %p105 = scmp.eq.s32.totalorder %s13, 1
      %p106 = scmp.ne.s32.totalorder %s101, %s103
      %p107 = scmp.eq.s32.totalorder %s13, 0
      %p108 = por %p106, %p107
      %p109 = scmp.ne.s32.totalorder %s101, %s103
      %p110 = scmp.eq.s32.totalorder %s18, 1
      %p111 = por %p109, %p110
      %p112 = scmp.ne.s32.totalorder %s103, %s104
      %p113 = scmp.eq.s32.totalorder %s18, 0
      %p114 = por %p112, %p113
      %p115 = scmp.ne.s32.totalorder %s103, %s104
      %p116 = scmp.eq.s32.totalorder %s19, 1
      %p117 = por %p115, %p116
      %p119 = scmp.ne.s32.totalorder %s104, %s118
      %p120 = scmp.eq.s32.totalorder %s19, 0
      %p121 = por %p119, %p120
      %s122 = ssub.s32 %s20, %s32
      %s123 = ssub.s32 %s21, %s28
      %s124 = sor.u32 %s122, %s123
      %p125 = scmp.eq.s32.totalorder %s124, 0
      %s127 = sadd.s32 %s126, 1
      %s128 = scalar_select %p125, %s126, %s127
      %p131 = pneg %p125
      %p132 = scmp.eq.s32.totalorder %s13, 1
      %p133 = por %p131, %p132
      %p134 = scmp.ne.s32.totalorder %s126, %s129
      %p135 = scmp.eq.s32.totalorder %s13, 0
      %p136 = por %p134, %p135
      %p137 = scmp.ne.s32.totalorder %s126, %s129
      %p138 = scmp.eq.s32.totalorder %s18, 1
      %p139 = por %p137, %p138
      %p140 = scmp.ne.s32.totalorder %s129, %s130
      %p141 = scmp.eq.s32.totalorder %s18, 0
      %p142 = por %p140, %p141
      %p143 = scmp.ne.s32.totalorder %s129, %s130
      %p144 = scmp.eq.s32.totalorder %s19, 1
      %p145 = por %p143, %p144
      %p147 = scmp.ne.s32.totalorder %s130, %s146
      %p148 = scmp.eq.s32.totalorder %s19, 0
      %p149 = por %p147, %p148
      %p150 = scmp.le.s32.totalorder 1, %s13
      %p151 = scmp.lt.s32.totalorder %s13, 3
      %p152 = pnand %p150, %p151
      %p153 = pneg %p152
      // Predicated region
      $region9: #{tpu_custom_call.1} parent=5 // pred_check
        _
      $region10: #{tpu_custom_call.1} parent=5 // pred_check_branch
        %155 = sbr.rel (%p152) target = $region12
      $region11: #{tpu_custom_call.1} parent=5 // pred_region
        %s156 = ssub.s32 %s13, 1
        // Predicated region
        $region13: #{tpu_custom_call.1} parent=11 // pred_check
          %p157 = pneg %p72
        $region14: #{tpu_custom_call.1} parent=11 // pred_check_branch
          %159 = sbr.rel (%p157) target = $region16
        $region15: #{tpu_custom_call.1} parent=11 // pred_region
          _
        $region16: #{tpu_custom_call.1} parent=11 // pred_fallthru
          _
        // Predicated region
        $region17: #{tpu_custom_call.1} parent=11 // pred_check
          %p160 = pneg %p93
        $region18: #{tpu_custom_call.1} parent=11 // pred_check_branch
          %162 = sbr.rel (%p160) target = $region20
        $region19: #{tpu_custom_call.1} parent=11 // pred_region
          _
        $region20: #{tpu_custom_call.1} parent=11 // pred_fallthru
          _
        // Predicated region
        $region21: #{tpu_custom_call.1} parent=11 // pred_check
          %p163 = pneg %p114
        $region22: #{tpu_custom_call.1} parent=11 // pred_check_branch
          %165 = sbr.rel (%p163) target = $region24
        $region23: #{tpu_custom_call.1} parent=11 // pred_region
          _
        $region24: #{tpu_custom_call.1} parent=11 // pred_fallthru
          _
      $region12: #{tpu_custom_call.1} parent=5 // pred_fallthru
        _
      %p166 = scmp.lt.s32.totalorder %s13, 2
      // Predicated region
      $region25: #{tpu_custom_call.1} parent=5 // pred_check
        %p167 = pneg %p166
      $region26: #{tpu_custom_call.1} parent=5 // pred_check_branch
        %169 = sbr.rel (%p167) target = $region28
      $region27: #{tpu_custom_call.1} parent=5 // pred_region
        // Predicated region
        $region29: #{tpu_custom_call.1} parent=27 // pred_check
          %p170 = pneg %p45
        $region30: #{tpu_custom_call.1} parent=27 // pred_check_branch
          %172 = sbr.rel (%p170) target = $region32
        $region31: #{tpu_custom_call.1} parent=27 // pred_region
          %p173 = scmp.lt.s32.totalorder %s20, 1
          %s174 = scalar_select %p173, %s20, 1
          %s175 = smul.addr %s174, 3
          %s176 = smul.addr %s175, 8
          %s177 = scalar_lea.vmem %s0, %s176
        $region32: #{tpu_custom_call.1} parent=27 // pred_fallthru
          _
      $region28: #{tpu_custom_call.1} parent=5 // pred_fallthru
        _
      %p178 = scmp.le.s32.totalorder 1, %s13
      %p179 = scmp.lt.s32.totalorder %s13, 3
      %p180 = pnand %p178, %p179
      %p181 = pneg %p180
      // Predicated region
      $region33: #{tpu_custom_call.1} parent=5 // pred_check
        _
      $region34: #{tpu_custom_call.1} parent=5 // pred_check_branch
        %183 = sbr.rel (%p180) target = $region36
      $region35: #{tpu_custom_call.1} parent=5 // pred_region
        %s184 = ssub.s32 %s13, 1
        %p185 = scmp.lt.s32.totalorder %s22, 1
        %s186 = scalar_select %p185, %s22, 1
        %s187 = smul.addr %s186, 3
        %s188 = smul.addr %s187, 8
        %s189 = scalar_lea.vmem %s0, %s188
        %p190 = pneg %p51
        %p191 = pneg %p48
        %p192 = pneg %p72
        %p193 = pneg %p69
        %p194 = pneg %p93
        %p195 = pneg %p90
        %p196 = pneg %p114
        %p197 = pneg %p111
        %p198 = pneg %p142
        %p199 = pneg %p139
        %s200 = sand.u32 %s129, 1
        %s201 = scalar_lea.sflag [#allocation3], %s200
        %s202 = sand.u32 %s129, 1
        %s203 = smul.addr %s202, 16
        %s204 = scalar_lea.vmem [#allocation2], %s203
        %p205 = scmp.lt.s32.totalorder %s22, 1
        %s206 = scalar_select %p205, %s22, 1
        %s207 = smul.addr %s206, 3
        %s208 = smul.addr %s207, 8
        %s209 = scalar_lea.vmem %s0, %s208
        %s210 = smul.u32 2, %s23
        %v211 = vld [vmem:[%s1] sm:$0xff]
        %v212 = vld [vmem:[%s1 + $0x8] sm:$0xff]
        %v213 = vld [vmem:[%s1 + $0x10] sm:$0xff]
        %v214 = vld [vmem:[%s1 + $0x18] sm:$0xff]
        %v215 = vld [vmem:[%s1 + $0x20] sm:$0xff]
        %v216 = vld [vmem:[%s1 + $0x28] sm:$0xff]
        %v217 = vld [vmem:[%s1 + $0x30] sm:$0xff]
        %v218 = vld [vmem:[%s1 + $0x38] sm:$0xff]
        %v219 = vld [vmem:[%s1 + $0x40] sm:$0xff]
        %v220 = vld [vmem:[%s1 + $0x48] sm:$0xff]
        %v221 = vld [vmem:[%s1 + $0x50] sm:$0xff]
        %v222 = vld [vmem:[%s1 + $0x58] sm:$0xff]
        %v223 = vld [vmem:[%s1 + $0x60] sm:$0xff]
        %v224 = vld [vmem:[%s1 + $0x68] sm:$0xff]
        %v225 = vld [vmem:[%s1 + $0x70] sm:$0xff]
        %v226 = vld [vmem:[%s1 + $0x78] sm:$0xff]
        %v227 = vld [vmem:[%s3] sm:$0xff]
        %v228 = vld [vmem:[%s3 + $0x8] sm:$0xff]
        %v229 = vld [vmem:[%s3 + $0x10] sm:$0xff]
        %v230 = vld [vmem:[%s3 + $0x18] sm:$0xff]
        %v231 = vld [vmem:[%s3 + $0x20] sm:$0xff]
        %v232 = vld [vmem:[%s3 + $0x28] sm:$0xff]
        %v233 = vld [vmem:[%s3 + $0x30] sm:$0xff]
        %v234 = vld [vmem:[%s3 + $0x38] sm:$0xff]
        %v235 = vld [vmem:[%s3 + $0x40] sm:$0xff]
        %v236 = vld [vmem:[%s3 + $0x48] sm:$0xff]
        %v237 = vld [vmem:[%s3 + $0x50] sm:$0xff]
        %v238 = vld [vmem:[%s3 + $0x58] sm:$0xff]
        %v239 = vld [vmem:[%s3 + $0x60] sm:$0xff]
        %v240 = vld [vmem:[%s3 + $0x68] sm:$0xff]
        %v241 = vld [vmem:[%s3 + $0x70] sm:$0xff]
        %v242 = vld [vmem:[%s3 + $0x78] sm:$0xff]
        %v243 = vld [vmem:[%s3 + $0x80] sm:$0xff]
        %v244 = vld [vmem:[%s3 + $0x88] sm:$0xff]
        %v245 = vld [vmem:[%s3 + $0x90] sm:$0xff]
        %v246 = vld [vmem:[%s3 + $0x98] sm:$0xff]
        %v247 = vld [vmem:[%s3 + $0xa0] sm:$0xff]
        %v248 = vld [vmem:[%s3 + $0xa8] sm:$0xff]
        %v249 = vld [vmem:[%s3 + $0xb0] sm:$0xff]
        %v250 = vld [vmem:[%s3 + $0xb8] sm:$0xff]
        %v251 = vld [vmem:[%s3 + $0xc0] sm:$0xff]
        %v252 = vld [vmem:[%s3 + $0xc8] sm:$0xff]
        %v253 = vld [vmem:[%s3 + $0xd0] sm:$0xff]
        %v254 = vld [vmem:[%s3 + $0xd8] sm:$0xff]
        %v255 = vld [vmem:[%s3 + $0xe0] sm:$0xff]
        %v256 = vld [vmem:[%s3 + $0xe8] sm:$0xff]
        %v257 = vld [vmem:[%s3 + $0xf0] sm:$0xff]
        %v258 = vld [vmem:[%s3 + $0xf8] sm:$0xff]
        %v259 = vld [vmem:[%s2] sm:$0xff]
        %v260 = vld [vmem:[%s2 + $0x8] sm:$0xff]
        %v261 = vld [vmem:[%s2 + $0x10] sm:$0x1]
        %v262 = vld [vmem:[%s2 + $0x18] sm:$0x1]
        %s263 = smul.u32 %s23, 16
        %s264 = scalar_lea.vmem %s209, %s263
        %v265 = vld [vmem:[%s264] sm:$0xff]
        %v266 = vld [vmem:[%s264 + $0x8] sm:$0xff]
        %v267 = vld [vmem:[%s264 + $0x10] sm:$0x3]
        %vm268 = vcmask 523264
        %v270 = vsel %vm268, %v265, 0
        %v273 = vsel %vm268, %v266, 0
        %v276 = vsel %vm268, %v267, 0
        %278 = vmatprep.subr.mxu0 %v212
        %279 = vmatpush1.msra.mxu0 %v211
        %280 = vmatprep.subr.mxu0 %v214
        %281 = vmatpush1.msra.mxu0 %v213
        %282 = vmatprep.subr.mxu0 %v216
        %283 = vmatpush1.msra.mxu0 %v215
        %284 = vmatprep.subr.mxu0 %v218
        %285 = vmatpush1.msra.mxu0 %v217
        %286 = vmatprep.subr.mxu0 %v220
        %287 = vmatpush1.msra.mxu0 %v219
        %288 = vmatprep.subr.mxu0 %v222
        %289 = vmatpush1.msra.mxu0 %v221
        %290 = vmatprep.subr.mxu0 %v224
        %291 = vmatpush1.msra.mxu0 %v223
        %292 = vmatprep.subr.mxu0 %v226
        %293 = vmatpush1.msra.mxu0 %v225
        %294 = vmatprep.subr.mxu0 0.0
        %295 = vmatpush1.msra.mxu0 0.0
        %296 = vmatprep.subr.mxu0 0.0
        %297 = vmatpush1.msra.mxu0 0.0
        %298 = vmatprep.subr.mxu0 0.0
        %299 = vmatpush1.msra.mxu0 0.0
        %300 = vmatprep.subr.mxu0 0.0
        %301 = vmatpush1.msra.mxu0 0.0
        %302 = vmatprep.subr.mxu0 0.0
        %303 = vmatpush1.msra.mxu0 0.0
        %304 = vmatprep.subr.mxu0 0.0
        %305 = vmatpush1.msra.mxu0 0.0
        %306 = vmatprep.subr.mxu0 0.0
        %307 = vmatpush1.msra.mxu0 0.0
        %308 = vmatprep.subr.mxu0 0.0
        %309 = vmatpush1.msra.mxu0 0.0
        %310 = vmatprep.subr.mxu0 0.0
        %311 = vmatpush1.msra.mxu0 0.0
        %312 = vmatprep.subr.mxu0 0.0
        %313 = vmatpush1.msra.mxu0 0.0
        %314 = vmatprep.subr.mxu0 0.0
        %315 = vmatpush1.msra.mxu0 0.0
        %316 = vmatprep.subr.mxu0 0.0
        %317 = vmatpush1.msra.mxu0 0.0
        %318 = vmatprep.subr.mxu0 0.0
        %319 = vmatpush1.msra.mxu0 0.0
        %320 = vmatprep.subr.mxu0 0.0
        %321 = vmatpush1.msra.mxu0 0.0
        %322 = vmatprep.subr.mxu0 0.0
        %323 = vmatpush1.msra.mxu0 0.0
        %324 = vmatprep.subr.mxu0 0.0
        %325 = vmatpush1.msra.mxu0 0.0
        %326 = vmatprep.subr.mxu0 0.0
        %327 = vmatpush1.msra.mxu0 0.0
        %328 = vmatprep.subr.mxu0 0.0
        %329 = vmatpush1.msra.mxu0 0.0
        %330 = vmatprep.subr.mxu0 0.0
        %331 = vmatpush1.msra.mxu0 0.0
        %332 = vmatprep.subr.mxu0 0.0
        %333 = vmatpush1.msra.mxu0 0.0
        %334 = vmatprep.subr.mxu0 0.0
        %335 = vmatpush1.msra.mxu0 0.0
        %336 = vmatprep.subr.mxu0 0.0
        %337 = vmatpush1.msra.mxu0 0.0
        %338 = vmatprep.subr.mxu0 0.0
        %339 = vmatpush1.msra.mxu0 0.0
        %340 = vmatprep.subr.mxu0 0.0
        %341 = vmatpush1.msra.mxu0 0.0
        %342 = vmatprep.mubr.f32.mxu0 0.0
        %343 = vmatmul.mubr.f32.gmra.mrb[0].mxu0 %v270
        %v344 = vpop.f32.mrb[0].mxu0
        %v345 = vadd.f32 0.0, %v344
        %v346 = vpop.f32.mrb[0].mxu0
        %v347 = vadd.f32 0.0, %v346
        %348 = vmatprep.mubr.f32.mxu0 0.0
        %349 = vmatmul.mubr.f32.gmra.mrb[0].mxu0 %v273
        %v350 = vpop.f32.mrb[0].mxu0
        %v351 = vadd.f32 0.0, %v350
        %v352 = vpop.f32.mrb[0].mxu0
        %v353 = vadd.f32 0.0, %v352
        %354 = vmatprep.mubr.f32.mxu0 0.0
        %355 = vmatmul.mubr.f32.gmra.mrb[0].mxu0 %v276
        %v356 = vpop.f32.mrb[0].mxu0
        %v357 = vadd.f32 0.0, %v356
        %v358 = vpop.f32.mrb[0].mxu0
        %v359 = vadd.f32 0.0, %v358
        %360 = vdwg.mxu0
        %v361 = vmul.f32 %v345, 0.5
        %v362 = vmul.f32 %v347, 0.5
        %v363 = vmul.f32 %v351, 0.5
        %v364 = vmul.f32 %v353, 0.5
        %v365 = vmul.f32 %v357, 0.5
        %v366 = vmul.f32 %v359, 0.5
        %v367 = vmul.f32 %v345, 0.70710677
        %v368 = vmul.f32 %v347, 0.70710677
        %v369 = vmul.f32 %v351, 0.70710677
        %v370 = vmul.f32 %v353, 0.70710677
        %v371 = vmul.f32 %v357, 0.70710677
        %v372 = vmul.f32 %v359, 0.70710677
        %v373 = verf.f32.pop %v367
        %v374 = verf.f32.pop %v368
        %v375 = verf.f32.pop %v369
        %v376 = verf.f32.pop %v370
        %v377 = verf.f32.pop %v371
        %v378 = verf.f32.pop %v372
        %v379 = vadd.f32 %v373, 1.0
        %v380 = vadd.f32 %v374, 1.0
        %v381 = vadd.f32 %v375, 1.0
        %v382 = vadd.f32 %v376, 1.0
        %v383 = vadd.f32 %v377, 1.0
        %v384 = vadd.f32 %v378, 1.0
        %v385 = vmul.f32 %v361, %v379
        %v386 = vmul.f32 %v362, %v380
        %v387 = vmul.f32 %v363, %v381
        %v388 = vmul.f32 %v364, %v382
        %v389 = vmul.f32 %v365, %v383
        %v390 = vmul.f32 %v366, %v384
        %v391 = vlaneseq
        %v392 = vand.u32 %v391, 127
        %v393 = vadd.s32 %v392, 128
        %vm394 = vcmp.ge.s32.totalorder %v392, 16
        %vm395 = vcmp.ge.s32.totalorder %v393, 16
        %vm396 = vcmp.lt.s32.totalorder %v392, 240
        %vm397 = vcmp.lt.s32.totalorder %v393, 240
        %v398 = vlaneseq
        %v399 = vshrl.u32 %v398, 7
        %v400 = vsub.s32 1, %v399
        %v401 = vrot.slane %v259, %v400
        %v402 = vlaneseq
        %v403 = vshrl.u32 %v402, 7
        %v404 = vsub.s32 1, %v403
        %v405 = vrot.slane %v260, %v404
        %v406 = vmul.f32 %v385, %v401
        %v407 = vmul.f32 %v386, %v405
        %v408 = vmul.f32 %v387, %v401
        %v409 = vmul.f32 %v388, %v405
        %v410 = vadd.f32 %v406, 0.0
        %v411 = vadd.f32 %v407, 0.0
        %v412 = vadd.f32 %v408, 0.0
        %v413 = vadd.f32 %v409, 0.0
        %414 = vrot.lane.b32.xlu0 %v385, 16
        %v415 = vpop.permute.xlu0 %414
        %416 = vrot.lane.b32.xlu0 %v387, 16
        %v417 = vpop.permute.xlu0 %416
        %418 = vrot.lane.b32.xlu0 %v386, 16
        %v419 = vpop.permute.xlu0 %418
        %420 = vrot.lane.b32.xlu0 %v388, 16
        %v421 = vpop.permute.xlu0 %420
        %vm422 = vcmp.lt.s32.totalorder %v392, 16
        %v423 = vsel %vm422, %v415, %v419
        %v424 = vsel %vm422, %v417, %v421
        %v425 = vsel %vm422, %v419, %v415
        %v426 = vsel %vm422, %v421, %v417
        %v427 = vsel %vm394, %v425, 0.0
        %v428 = vsel %vm395, %v423, 0.0
        %v429 = vsel %vm394, %v426, 0.0
        %v430 = vsel %vm395, %v424, 0.0
        %v431 = vlaneseq
        %v432 = vshrl.u32 %v431, 7
        %v433 = vsub.s32 0, %v432
        %v434 = vrot.slane %v259, %v433
        %v435 = vlaneseq
        %v436 = vshrl.u32 %v435, 7
        %v437 = vsub.s32 0, %v436
        %v438 = vrot.slane %v260, %v437
        %v439 = vmul.f32 %v427, %v434
        %v440 = vmul.f32 %v428, %v438
        %v441 = vmul.f32 %v429, %v434
        %v442 = vmul.f32 %v430, %v438
        %v443 = vadd.f32 %v410, %v439
        %v444 = vadd.f32 %v411, %v440
        %v445 = vadd.f32 %v412, %v441
        %v446 = vadd.f32 %v413, %v442
        %447 = vrot.lane.b32.xlu0 %v385, 112
        %v448 = vpop.permute.xlu0 %447
        %449 = vrot.lane.b32.xlu0 %v387, 112
        %v450 = vpop.permute.xlu0 %449
        %451 = vrot.lane.b32.xlu0 %v386, 112
        %v452 = vpop.permute.xlu0 %451
        %453 = vrot.lane.b32.xlu0 %v388, 112
        %v454 = vpop.permute.xlu0 %453
        %vm455 = vcmp.lt.s32.totalorder %v392, 112
        %v456 = vsel %vm455, %v448, %v452
        %v457 = vsel %vm455, %v450, %v454
        %v458 = vsel %vm455, %v452, %v448
        %v459 = vsel %vm455, %v454, %v450
        %v460 = vsel %vm396, %v456, 0.0
        %v461 = vsel %vm397, %v458, 0.0
        %v462 = vsel %vm396, %v457, 0.0
        %v463 = vsel %vm397, %v459, 0.0
        %v464 = vlaneseq
        %v465 = vshrl.u32 %v464, 7
        %v466 = vsub.s32 2, %v465
        %v467 = vrot.slane %v259, %v466
        %v468 = vlaneseq
        %v469 = vshrl.u32 %v468, 7
        %v470 = vsub.s32 2, %v469
        %v471 = vrot.slane %v260, %v470
        %v472 = vmul.f32 %v460, %v467
        %v473 = vmul.f32 %v461, %v471
        %v474 = vmul.f32 %v462, %v467
        %v475 = vmul.f32 %v463, %v471
        %v476 = vadd.f32 %v443, %v472
        %v477 = vadd.f32 %v444, %v473
        %v478 = vadd.f32 %v445, %v474
        %v479 = vadd.f32 %v446, %v475
        %v480 = vlaneseq
        %v481 = vshrl.u32 %v480, 7
        %v482 = vsub.s32 4, %v481
        %v483 = vrot.slane %v259, %v482
        %v484 = vlaneseq
        %v485 = vshrl.u32 %v484, 7
        %v486 = vsub.s32 4, %v485
        %v487 = vrot.slane %v260, %v486
        %v488 = vmul.f32 %v385, %v483
        %v489 = vmul.f32 %v386, %v487
        %v490 = vmul.f32 %v387, %v483
        %v491 = vmul.f32 %v388, %v487
        %v492 = vmul.f32 %v389, %v483
        %v493 = vmul.f32 %v390, %v487
        %vm500 = vcmask 1046528
        %v501 = vrot.slane %v488, 1
        %v502 = vrot.slane %v490, 1
        %v503 = vsel %vm500, %v501, %v502
        %v504 = vrot.slane %v489, 1
        %v505 = vrot.slane %v491, 1
        %v506 = vsel %vm500, %v504, %v505
        %v507 = vrot.slane %v492, 1
        %v508 = vsel %vm500, %v502, %v507
        %v509 = vrot.slane %v493, 1
        %v510 = vsel %vm500, %v505, %v509
        %v515 = vadd.f32 %v476, %v503
        %v516 = vadd.f32 %v477, %v506
        %v517 = vadd.f32 %v478, %v508
        %v518 = vadd.f32 %v479, %v510
        %v525 = vrot.slane %v385, 1
        %v526 = vrot.slane %v387, 1
        %v527 = vsel %vm500, %v525, %v526
        %v528 = vrot.slane %v386, 1
        %v529 = vrot.slane %v388, 1
        %v530 = vsel %vm500, %v528, %v529
        %v531 = vrot.slane %v389, 1
        %v532 = vsel %vm500, %v526, %v531
        %v533 = vrot.slane %v390, 1
        %v534 = vsel %vm500, %v529, %v533
        %539 = vrot.lane.b32.xlu0 %v527, 16
        %v540 = vpop.permute.xlu0 %539
        %541 = vrot.lane.b32.xlu0 %v532, 16
        %v542 = vpop.permute.xlu0 %541
        %543 = vrot.lane.b32.xlu0 %v530, 16
        %v544 = vpop.permute.xlu0 %543
        %545 = vrot.lane.b32.xlu0 %v534, 16
        %v546 = vpop.permute.xlu0 %545
        %v547 = vsel %vm422, %v540, %v544
        %v548 = vsel %vm422, %v542, %v546
        %v549 = vsel %vm422, %v544, %v540
        %v550 = vsel %vm422, %v546, %v542
        %v551 = vsel %vm394, %v549, 0.0
        %v552 = vsel %vm395, %v547, 0.0
        %v553 = vsel %vm394, %v550, 0.0
        %v554 = vsel %vm395, %v548, 0.0
        %v555 = vlaneseq
        %v556 = vshrl.u32 %v555, 7
        %v557 = vsub.s32 3, %v556
        %v558 = vrot.slane %v259, %v557
        %v559 = vlaneseq
        %v560 = vshrl.u32 %v559, 7
        %v561 = vsub.s32 3, %v560
        %v562 = vrot.slane %v260, %v561
        %v563 = vmul.f32 %v551, %v558
        %v564 = vmul.f32 %v552, %v562
        %v565 = vmul.f32 %v553, %v558
        %v566 = vmul.f32 %v554, %v562
        %v567 = vadd.f32 %v515, %v563
        %v568 = vadd.f32 %v516, %v564
        %v569 = vadd.f32 %v517, %v565
        %v570 = vadd.f32 %v518, %v566
        %571 = vrot.lane.b32.xlu0 %v527, 112
        %v572 = vpop.permute.xlu0 %571
        %573 = vrot.lane.b32.xlu0 %v532, 112
        %v574 = vpop.permute.xlu0 %573
        %575 = vrot.lane.b32.xlu0 %v530, 112
        %v576 = vpop.permute.xlu0 %575
        %577 = vrot.lane.b32.xlu0 %v534, 112
        %v578 = vpop.permute.xlu0 %577
        %v579 = vsel %vm455, %v572, %v576
        %v580 = vsel %vm455, %v574, %v578
        %v581 = vsel %vm455, %v576, %v572
        %v582 = vsel %vm455, %v578, %v574
        %v583 = vsel %vm396, %v579, 0.0
        %v584 = vsel %vm397, %v581, 0.0
        %v585 = vsel %vm396, %v580, 0.0
        %v586 = vsel %vm397, %v582, 0.0
        %v587 = vlaneseq
        %v588 = vshrl.u32 %v587, 7
        %v589 = vsub.s32 5, %v588
        %v590 = vrot.slane %v259, %v589
        %v591 = vlaneseq
        %v592 = vshrl.u32 %v591, 7
        %v593 = vsub.s32 5, %v592
        %v594 = vrot.slane %v260, %v593
        %v595 = vmul.f32 %v583, %v590
        %v596 = vmul.f32 %v584, %v594
        %v597 = vmul.f32 %v585, %v590
        %v598 = vmul.f32 %v586, %v594
        %v599 = vadd.f32 %v567, %v595
        %v600 = vadd.f32 %v568, %v596
        %v601 = vadd.f32 %v569, %v597
        %v602 = vadd.f32 %v570, %v598
        %v603 = vlaneseq
        %v604 = vshrl.u32 %v603, 7
        %v605 = vsub.s32 7, %v604
        %v606 = vrot.slane %v259, %v605
        %v607 = vlaneseq
        %v608 = vshrl.u32 %v607, 7
        %v609 = vsub.s32 7, %v608
        %v610 = vrot.slane %v260, %v609
        %v611 = vmul.f32 %v385, %v606
        %v612 = vmul.f32 %v386, %v610
        %v613 = vmul.f32 %v387, %v606
        %v614 = vmul.f32 %v388, %v610
        %v615 = vmul.f32 %v389, %v606
        %v616 = vmul.f32 %v390, %v610
        %vm623 = vcmask 1045504
        %v624 = vrot.slane %v611, 2
        %v625 = vrot.slane %v613, 2
        %v626 = vsel %vm623, %v624, %v625
        %v627 = vrot.slane %v612, 2
        %v628 = vrot.slane %v614, 2
        %v629 = vsel %vm623, %v627, %v628
        %v630 = vrot.slane %v615, 2
        %v631 = vsel %vm623, %v625, %v630
        %v632 = vrot.slane %v616, 2
        %v633 = vsel %vm623, %v628, %v632
        %v638 = vadd.f32 %v599, %v626
        %v639 = vadd.f32 %v600, %v629
        %v640 = vadd.f32 %v601, %v631
        %v641 = vadd.f32 %v602, %v633
        %v642 = vrot.slane %v385, 2
        %v643 = vrot.slane %v387, 2
        %v644 = vsel %vm623, %v642, %v643
        %v645 = vrot.slane %v386, 2
        %v646 = vrot.slane %v388, 2
        %v647 = vsel %vm623, %v645, %v646
        %v648 = vrot.slane %v389, 2
        %v649 = vsel %vm623, %v643, %v648
        %v650 = vrot.slane %v390, 2
        %v651 = vsel %vm623, %v646, %v650
        %656 = vrot.lane.b32.xlu0 %v644, 16
        %v657 = vpop.permute.xlu0 %656
        %658 = vrot.lane.b32.xlu0 %v649, 16
        %v659 = vpop.permute.xlu0 %658
        %660 = vrot.lane.b32.xlu0 %v647, 16
        %v661 = vpop.permute.xlu0 %660
        %662 = vrot.lane.b32.xlu0 %v651, 16
        %v663 = vpop.permute.xlu0 %662
        %v664 = vsel %vm422, %v657, %v661
        %v665 = vsel %vm422, %v659, %v663
        %v666 = vsel %vm422, %v661, %v657
        %v667 = vsel %vm422, %v663, %v659
        %v668 = vsel %vm394, %v666, 0.0
        %v669 = vsel %vm395, %v664, 0.0
        %v670 = vsel %vm394, %v667, 0.0
        %v671 = vsel %vm395, %v665, 0.0
        %v672 = vlaneseq
        %v673 = vshrl.u32 %v672, 7
        %v674 = vsub.s32 6, %v673
        %v675 = vrot.slane %v259, %v674
        %v676 = vlaneseq
        %v677 = vshrl.u32 %v676, 7
        %v678 = vsub.s32 6, %v677
        %v679 = vrot.slane %v260, %v678
        %v680 = vmul.f32 %v668, %v675
        %v681 = vmul.f32 %v669, %v679
        %v682 = vmul.f32 %v670, %v675
        %v683 = vmul.f32 %v671, %v679
        %v684 = vadd.f32 %v638, %v680
        %v685 = vadd.f32 %v639, %v681
        %v686 = vadd.f32 %v640, %v682
        %v687 = vadd.f32 %v641, %v683
        %688 = vrot.lane.b32.xlu0 %v644, 112
        %v689 = vpop.permute.xlu0 %688
        %690 = vrot.lane.b32.xlu0 %v649, 112
        %v691 = vpop.permute.xlu0 %690
        %692 = vrot.lane.b32.xlu0 %v647, 112
        %v693 = vpop.permute.xlu0 %692
        %694 = vrot.lane.b32.xlu0 %v651, 112
        %v695 = vpop.permute.xlu0 %694
        %v696 = vsel %vm455, %v689, %v693
        %v697 = vsel %vm455, %v691, %v695
        %v698 = vsel %vm455, %v693, %v689
        %v699 = vsel %vm455, %v695, %v691
        %v700 = vsel %vm396, %v696, 0.0
        %v701 = vsel %vm397, %v698, 0.0
        %v702 = vsel %vm396, %v697, 0.0
        %v703 = vsel %vm397, %v699, 0.0
        %v704 = vlaneseq
        %v705 = vshrl.u32 %v704, 7
        %v706 = vsub.s32 0, %v705
        %v707 = vrot.slane %v261, %v706
        %v708 = vlaneseq
        %v709 = vshrl.u32 %v708, 7
        %v710 = vsub.s32 0, %v709
        %v711 = vrot.slane %v262, %v710
        %v712 = vmul.f32 %v700, %v707
        %v713 = vmul.f32 %v701, %v711
        %v714 = vmul.f32 %v702, %v707
        %v715 = vmul.f32 %v703, %v711
        %v716 = vadd.f32 %v684, %v712
        %v717 = vadd.f32 %v685, %v713
        %v718 = vadd.f32 %v686, %v714
        %v719 = vadd.f32 %v687, %v715
        %v720 = vmul.f32 %v716, 0.5
        %v721 = vmul.f32 %v717, 0.5
        %v722 = vmul.f32 %v718, 0.5
        %v723 = vmul.f32 %v719, 0.5
        %v724 = vmul.f32 %v716, 0.70710677
        %v725 = vmul.f32 %v717, 0.70710677
        %v726 = vmul.f32 %v718, 0.70710677
        %v727 = vmul.f32 %v719, 0.70710677
        %v728 = verf.f32.pop %v724
        %v729 = verf.f32.pop %v725
        %v730 = verf.f32.pop %v726
        %v731 = verf.f32.pop %v727
        %v732 = vadd.f32 %v728, 1.0
        %v733 = vadd.f32 %v729, 1.0
        %v734 = vadd.f32 %v730, 1.0
        %v735 = vadd.f32 %v731, 1.0
        %v736 = vmul.f32 %v720, %v732
        %v737 = vmul.f32 %v721, %v733
        %v738 = vmul.f32 %v722, %v734
        %v739 = vmul.f32 %v723, %v735
        %740 = vmatprep.subr.mxu0 0.0
        %741 = vmatpush1.msra.mxu0 %v227
        %742 = vmatprep.subr.mxu0 0.0
        %743 = vmatpush1.msra.mxu0 %v228
        %744 = vmatprep.subr.mxu0 0.0
        %745 = vmatpush1.msra.mxu0 %v229
        %746 = vmatprep.subr.mxu0 0.0
        %747 = vmatpush1.msra.mxu0 %v230
        %748 = vmatprep.subr.mxu0 0.0
        %749 = vmatpush1.msra.mxu0 %v231
        %750 = vmatprep.subr.mxu0 0.0
        %751 = vmatpush1.msra.mxu0 %v232
        %752 = vmatprep.subr.mxu0 0.0
        %753 = vmatpush1.msra.mxu0 %v233
        %754 = vmatprep.subr.mxu0 0.0
        %755 = vmatpush1.msra.mxu0 %v234
        %756 = vmatprep.subr.mxu0 0.0
        %757 = vmatpush1.msra.mxu0 %v235
        %758 = vmatprep.subr.mxu0 0.0
        %759 = vmatpush1.msra.mxu0 %v236
        %760 = vmatprep.subr.mxu0 0.0
        %761 = vmatpush1.msra.mxu0 %v237
        %762 = vmatprep.subr.mxu0 0.0
        %763 = vmatpush1.msra.mxu0 %v238
        %764 = vmatprep.subr.mxu0 0.0
        %765 = vmatpush1.msra.mxu0 %v239
        %766 = vmatprep.subr.mxu0 0.0
        %767 = vmatpush1.msra.mxu0 %v240
        %768 = vmatprep.subr.mxu0 0.0
        %769 = vmatpush1.msra.mxu0 %v241
        %770 = vmatprep.subr.mxu0 0.0
        %771 = vmatpush1.msra.mxu0 %v242
        %772 = vmatprep.subr.mxu0 0.0
        %773 = vmatpush1.msra.mxu0 %v243
        %774 = vmatprep.subr.mxu0 0.0
        %775 = vmatpush1.msra.mxu0 %v244
        %776 = vmatprep.subr.mxu0 0.0
        %777 = vmatpush1.msra.mxu0 %v245
        %778 = vmatprep.subr.mxu0 0.0
        %779 = vmatpush1.msra.mxu0 %v246
        %780 = vmatprep.subr.mxu0 0.0
        %781 = vmatpush1.msra.mxu0 %v247
        %782 = vmatprep.subr.mxu0 0.0
        %783 = vmatpush1.msra.mxu0 %v248
        %784 = vmatprep.subr.mxu0 0.0
        %785 = vmatpush1.msra.mxu0 %v249
        %786 = vmatprep.subr.mxu0 0.0
        %787 = vmatpush1.msra.mxu0 %v250
        %788 = vmatprep.subr.mxu0 0.0
        %789 = vmatpush1.msra.mxu0 %v251
        %790 = vmatprep.subr.mxu0 0.0
        %791 = vmatpush1.msra.mxu0 %v252
        %792 = vmatprep.subr.mxu0 0.0
        %793 = vmatpush1.msra.mxu0 %v253
        %794 = vmatprep.subr.mxu0 0.0
        %795 = vmatpush1.msra.mxu0 %v254
        %796 = vmatprep.subr.mxu0 0.0
        %797 = vmatpush1.msra.mxu0 %v255
        %798 = vmatprep.subr.mxu0 0.0
        %799 = vmatpush1.msra.mxu0 %v256
        %800 = vmatprep.subr.mxu0 0.0
        %801 = vmatpush1.msra.mxu0 %v257
        %802 = vmatprep.subr.mxu0 0.0
        %803 = vmatpush1.msra.mxu0 %v258
        %804 = vmatprep.mubr.f32.mxu0 %v737
        %805 = vmatmul.mubr.f32.gmra.mrb[0].mxu0 %v736
        %v806 = vpop.f32.mrb[0].mxu0
        %v807 = vadd.f32 0.0, %v806
        %v808 = vpop.f32.mrb[0].mxu0
        %809 = vmatprep.mubr.f32.mxu0 %v739
        %810 = vmatmul.mubr.f32.gmra.mrb[0].mxu0 %v738
        %v811 = vpop.f32.mrb[0].mxu0
        %v812 = vadd.f32 0.0, %v811
        %v813 = vpop.f32.mrb[0].mxu0
        %814 = vdwg.mxu0
        %815 = vst.msk [vmem:[%s204] sm:$0xff] %vm268, %v807
        %816 = vst.msk [vmem:[%s204 + $0x8] sm:$0xff] %vm268, %v812
        %s817 = sand.u32 %s129, 1
        %s818 = scalar_lea.sflag [#allocation3], %s817
        %s819 = sand.u32 %s129, 1
        %s820 = smul.addr %s819, 16
        %s821 = scalar_lea.vmem [#allocation2], %s820
        // Predicated region
        $region37: #{tpu_custom_call.1} parent=35 // pred_check
          %p822 = pneg %p139
        $region38: #{tpu_custom_call.1} parent=35 // pred_check_branch
          %824 = sbr.rel (%p822) target = $region40
        $region39: #{tpu_custom_call.1} parent=35 // pred_region
          %s825 = smul.u32 2, %s23
          %s827 = ssub.s32 256, 256
          %828 = vsyncadd %s818, %s827
          %s829 = smul.addr %s22, 2
          %s830 = sadd.s32 %s825, %s829
          %s831 = smul.addr %s830, 128
          %s832 = scalar_lea.hbm %s4, %s831
          %s833 = sshll.u32 %s821, 4
          %s834 = int_to_ptr.vmem [resolvable:$true] %s833
          %839 = dma.vmem_to_hbm [thread:$0]  %s834, 256, %s832, %s818, 128, 128, 8
        $region40: #{tpu_custom_call.1} parent=35 // pred_fallthru
          _
      $region36: #{tpu_custom_call.1} parent=5 // pred_fallthru
        _
      %p840 = scmp.le.s32.totalorder 2, %s13
      // Predicated region
      $region41: #{tpu_custom_call.1} parent=5 // pred_check
        %p841 = pneg %p840
      $region42: #{tpu_custom_call.1} parent=5 // pred_check_branch
        %843 = sbr.rel (%p841) target = $region44
      $region43: #{tpu_custom_call.1} parent=5 // pred_region
        %s844 = ssub.s32 %s13, 2
        // Predicated region
        $region45: #{tpu_custom_call.1} parent=43 // pred_check
          %p845 = pneg %p145
        $region46: #{tpu_custom_call.1} parent=43 // pred_check_branch
          %847 = sbr.rel (%p845) target = $region48
        $region47: #{tpu_custom_call.1} parent=43 // pred_region
          %s848 = sand.u32 %s130, 1
          %s849 = scalar_lea.sflag [#allocation3], %s848
          %s850 = sand.u32 %s130, 1
          %s851 = smul.addr %s850, 16
          %s852 = scalar_lea.vmem [#allocation2], %s851
          %853 = dma.done %s849, 256
        $region48: #{tpu_custom_call.1} parent=43 // pred_fallthru
          _
      $region44: #{tpu_custom_call.1} parent=5 // pred_fallthru
        _
    $region6: #{tpu_custom_call.1} parent=1 // loop_footer
      %s17 = sadd.s32 1, %s13
    $region7: #{tpu_custom_call.1} parent=1 // loop_footer_branch
      %12 = sbr.rel target = $region3
    $region8: #{tpu_custom_call.1} parent=1 // loop_exit
      _
    %854 = vsyncpa [#allocation3], 1
    %s855 = scalar_lea.sflag [#allocation3], 1
    %856 = vsyncpa %s855, 1

</llo_original>
